<compile_context>
chip_gen: v5e
topology: v5e:2x2
jax: 0.10.0
libtpu: 0.0.40
codegen_flags: <defaults>
</compile_context>

<pallas_src>
import functools

import jax
import jax.numpy as jnp
from jax.experimental import pallas as pl
from jax.experimental.pallas import tpu as pltpu


# --------------------------------------------------------------------------- #
# Kernel
# --------------------------------------------------------------------------- #
def _se_apply_kernel(x_ref, w1_ref, b1_ref, w2_ref, b2_ref, o_ref, *,
                     channels_last, f32_gate):
    """x_ref / o_ref: (Nb, HW, C) if channels_last else (Nb, C, HW)."""
    x = x_ref[...]                                            # one native-dtype load

    # Squeeze: global average pool over spatial.  Only the (Nb, C) result is
    # held in f32; the full tile is never staged in f32.
    spatial_axis = 1 if channels_last else 2
    s = jnp.mean(x, axis=spatial_axis, dtype=jnp.float32)     # (Nb, C)

    # Excite: FC reduce -> ReLU -> FC expand -> sigmoid (tiny, all f32).
    h = jnp.dot(s, w1_ref[...], preferred_element_type=jnp.float32) + b1_ref[...]
    h = jnp.maximum(h, 0.0)                                   # (Nb, Cr)
    g = jnp.dot(h, w2_ref[...], preferred_element_type=jnp.float32) + b2_ref[...]
    g = jax.nn.sigmoid(g)                                     # (Nb, C) f32

    # Apply: broadcast the per-(n, c) gate over all spatial positions.
    g3 = g[:, None, :] if channels_last else g[:, :, None]
    if f32_gate:
        # v5e has no bf16 VALU (operands upconvert anyway) -> keep f32 numerics.
        y = x.astype(jnp.float32) * g3
    else:
        # bf16/fp-native multiply on v6e / v7x (no-op cast for f32 inputs).
        y = x * g3.astype(x.dtype)
    o_ref[...] = y.astype(o_ref.dtype)


# --------------------------------------------------------------------------- #
# Host-side tuning helpers
# --------------------------------------------------------------------------- #
def _tpu_params():
    """Returns (min_grid_steps, target_block_bytes, vmem_cap_bytes, is_v5e)."""
    kind = ""
    try:
        kind = jax.devices()[0].device_kind.lower()
    except Exception:
        pass
    is_v7 = "v7" in kind
    is_v5e = ("v5e" in kind) or ("v5 lite" in kind) or ("v5lite" in kind)

    try:
        vmem_phys = int(pltpu.get_tpu_info().vmem_capacity_bytes)
    except Exception:
        vmem_phys = (64 << 20) if is_v7 else (128 << 20)
    # Never request the full physical VMEM (leave headroom for Mosaic internal
    # scratch); this matters most on v7x's 64 MiB per TensorCore.
    vmem_cap = max(16 << 20, min(vmem_phys - (16 << 20), 96 << 20))

    # v7x shards a "parallel" grid axis over 2 TensorCores: want >= 2 pipelined
    # steps per core so DMA overlaps compute and the cores stay balanced.
    min_steps = 4 if is_v7 else 2
    # ~4 MiB blocks sit at >= 85% of HBM roofline; larger VMEM on v5e/v6e lets
    # us push to ~8 MiB.
    target_block = (4 << 20) if is_v7 else (8 << 20)
    return min_steps, target_block, vmem_cap, is_v5e


def _pick_batch_tile(N, bytes_per_image, target_bytes, min_steps):
    """Largest batch tile Nb whose x block is <= target_bytes while keeping at
    least `min_steps` grid steps when N allows.  Prefers divisors of N (no
    masked tail); otherwise returns a non-divisor Nb for a cdiv grid."""
    max_nb = max(1, target_bytes // max(1, bytes_per_image))
    max_nb = min(max_nb, N)
    if N >= min_steps:
        max_nb = min(max_nb, max(1, N // min_steps))
    for nb in range(max_nb, 0, -1):
        if N % nb == 0:
            if 2 * nb > max_nb:      # divisor close enough to the size target
                return nb
            break
    return max_nb                    # cdiv grid + masked partial last block


def _block_spec(shape, index_map, buffer_count=2):
    """BlockSpec with an optional non-default buffer count (falls back to the
    default double-buffering on JAX versions without pipeline_mode)."""
    if buffer_count == 2:
        return pl.BlockSpec(shape, index_map)
    try:
        return pl.BlockSpec(shape, index_map, pipeline_mode=pl.Buffered(buffer_count))
    except TypeError:
        return pl.BlockSpec(shape, index_map)


# --------------------------------------------------------------------------- #
# Wrapper
# --------------------------------------------------------------------------- #
def se_apply(x_nchw, w1, b1, w2, b2):
    """x_nchw: (N, C, H, W).  w1: (C, Cr), b1: (1, Cr), w2: (Cr, C), b2: (1, C)."""
    N, C, H, W = x_nchw.shape
    HW = H * W
    Cr = w1.shape[1]
    itemsize = x_nchw.dtype.itemsize

    min_steps, target_block, vmem_cap, is_v5e = _tpu_params()

    # Layout: put C on lanes when HW is not lane-aligned and C is wide enough
    # (production SE stages: HW = 49/196/784, C >= 128) -> unmasked lane-dense
    # stores.  Otherwise keep HW on lanes (already dense when HW % 128 == 0).
    channels_last = (HW % 128 != 0) and (C >= 128)
    if channels_last:
        # Layout plumbing only; in a fused NHWC pipeline this transpose would
        # disappear into the surrounding ops.
        x_in = jnp.transpose(x_nchw.reshape(N, C, HW), (0, 2, 1))    # (N, HW, C)
        block_inner = (HW, C)
    else:
        x_in = x_nchw.reshape(N, C, HW)                              # (N, C, HW)
        block_inner = (C, HW)

    # ---- batch tiling ------------------------------------------------------ #
    bytes_per_image = C * HW * itemsize
    target = min(target_block, max(1 << 20, vmem_cap // 5))
    nb = _pick_batch_tile(N, bytes_per_image, target, min_steps)
    grid_n = pl.cdiv(N, nb)
    block_bytes = nb * bytes_per_image

    weight_bytes = (w1.size * w1.dtype.itemsize + b1.size * b1.dtype.itemsize +
                    w2.size * w2.dtype.itemsize + b2.size * b2.dtype.itemsize)
    slack = 4 << 20                     # f32 squeeze temporaries + internal scratch

    # ---- VMEM budget / buffering ------------------------------------------ #
    xo_buffers = 2                      # double-buffer the streaming x / out blocks
    if 2 * xo_buffers * block_bytes + weight_bytes + slack > vmem_cap:
        xo_buffers = 1                  # huge single-image blocks: trade pipelining for fit
    if 2 * xo_buffers * block_bytes + weight_bytes + slack > vmem_cap:
        # TODO(synk): add a two-phase (squeeze over HW tiles, then apply) split
        # for single images whose activations exceed the per-core VMEM budget.
        raise ValueError(
            f"SEApply block of {block_bytes} bytes does not fit the "
            f"{vmem_cap}-byte VMEM budget even single-buffered")
    # Resident weights never re-DMA (constant index_map); a second buffer is
    # dead VMEM, but only bother single-buffering when they are big enough to
    # matter (large-C stages on v7x).
    w_buffers = 1 if weight_bytes > (2 << 20) else 2

    need = 2 * xo_buffers * block_bytes + w_buffers * weight_bytes + slack
    vmem_limit = int(min(vmem_cap, max(16 << 20, need)))

    # Advisory cost estimate: bandwidth-bound streaming op (read x, write out).
    cost = pl.CostEstimate(
        flops=2 * N * C * HW + 4 * N * C * Cr,
        transcendentals=N * C,
        bytes_accessed=2 * N * C * HW * itemsize + weight_bytes,
    )

    f32_gate = bool(is_v5e) or (x_nchw.dtype == jnp.float32)
    kernel = functools.partial(_se_apply_kernel,
                               channels_last=channels_last,
                               f32_gate=f32_gate)

    # TODO(synk): for N=1 serving on v7x this 1-D batch grid leaves one
    # TensorCore idle; a two-phase HW/C-split variant would use both cores.
    out_flat = pl.pallas_call(
        kernel,
        out_shape=jax.ShapeDtypeStruct((N,) + block_inner, x_nchw.dtype),
        grid_spec=pltpu.PrefetchScalarGridSpec(
            num_scalar_prefetch=0,
            grid=(grid_n,),
            in_specs=[
                _block_spec((nb,) + block_inner, lambda n: (n, 0, 0), xo_buffers),
                _block_spec((C, Cr), lambda n: (0, 0), w_buffers),   # w1 (resident)
                _block_spec((1, Cr), lambda n: (0, 0), w_buffers),   # b1 (resident)
                _block_spec((Cr, C), lambda n: (0, 0), w_buffers),   # w2 (resident)
                _block_spec((1, C), lambda n: (0, 0), w_buffers),    # b2 (resident)
            ],
            out_specs=_block_spec((nb,) + block_inner, lambda n: (n, 0, 0), xo_buffers),
        ),
        compiler_params=pltpu.CompilerParams(
            dimension_semantics=("parallel",),
            vmem_limit_bytes=vmem_limit,
        ),
        cost_estimate=cost,
    )(x_in, w1, b1, w2, b2)

    if channels_last:
        out_flat = jnp.transpose(out_flat, (0, 2, 1))     # back to (N, C, HW)
    return out_flat.reshape(N, C, H, W)


# --------------------------------------------------------------------------- #
# Reference + tests
# --------------------------------------------------------------------------- #
def se_apply_ref(x_nchw, w1, b1, w2, b2):
    """Pure-JAX reference for correctness checking."""
    xf = x_nchw.astype(jnp.float32)
    s = jnp.mean(xf, axis=(2, 3))                         # (N, C)
    h = jnp.maximum(s @ w1 + b1, 0.0)                     # (N, Cr)
    g = jax.nn.sigmoid(h @ w2 + b2)                       # (N, C)
    return (xf * g[:, :, None, None]).astype(x_nchw.dtype)


def _run_case(key, N, C, H, W, reduction, dtype=jnp.float32, atol=1e-5, rtol=1e-5):
    Cr = max(1, C // reduction)
    kx, k1, k2, k3, k4 = jax.random.split(key, 5)
    x = jax.random.normal(kx, (N, C, H, W), dtype=jnp.float32).astype(dtype)
    w1 = jax.random.normal(k1, (C, Cr), dtype=jnp.float32) * 0.1
    b1 = jax.random.normal(k2, (1, Cr), dtype=jnp.float32) * 0.1
    w2 = jax.random.normal(k3, (Cr, C), dtype=jnp.float32) * 0.1
    b2 = jax.random.normal(k4, (1, C), dtype=jnp.float32) * 0.1

    out = jax.block_until_ready(se_apply(x, w1, b1, w2, b2))
    ref = se_apply_ref(x, w1, b1, w2, b2)
    assert out.shape == (N, C, H, W)
    assert out.dtype == x.dtype
    ok = jnp.allclose(out.astype(jnp.float32), ref.astype(jnp.float32),
                      atol=atol, rtol=rtol)
    assert ok, f"mismatch vs reference for shape {(N, C, H, W)} dtype {dtype}"


if __name__ == "__main__":
    key = jax.random.PRNGKey(0)
    ks = jax.random.split(key, 4)

    # Primary small shape consistent with the module spec (HW lane-dense path).
    _run_case(ks[0], N=2, C=4, H=16, W=16, reduction=2)
    # Larger batch: exercises multi-image blocks (Nb > 1).
    _run_case(ks[1], N=8, C=4, H=16, W=16, reduction=2)
    # Awkward batch: non-divisor Nb -> cdiv grid with masked tail block.
    _run_case(ks[2], N=7, C=4, H=16, W=16, reduction=2)
    # Production-style SE stage: C on lanes (HW=49 not lane-aligned, C=128).
    _run_case(ks[3], N=4, C=128, H=7, W=7, reduction=16)
    # bf16 inputs (apply may run in reduced precision -> loose tolerance).
    _run_case(jax.random.PRNGKey(1), N=2, C=4, H=16, W=16, reduction=2,
              dtype=jnp.bfloat16, atol=3e-2, rtol=3e-2)

    print("KERNEL_OK")
</pallas_src>

<mosaic_0001>
module attributes {stable_mosaic.version = 11 : i64} {
  func.func @_se_apply_kernel(%arg0: i32, %arg1: memref<1x4x256xf32, #tpu.memory_space<vmem>>, %arg2: memref<4x2xf32, #tpu.memory_space<vmem>>, %arg3: memref<1x2xf32, #tpu.memory_space<vmem>>, %arg4: memref<2x4xf32, #tpu.memory_space<vmem>>, %arg5: memref<1x4xf32, #tpu.memory_space<vmem>>, %arg6: memref<1x4x256xf32, #tpu.memory_space<vmem>>) attributes {dimension_semantics = [#tpu.dimension_semantics<parallel>], iteration_bounds = array<i64: 2>, scalar_prefetch = 0 : i64, scratch_operands = 0 : i64, tpu.core_type = #tpu.core_type<tc>, window_params = [{transform_indices = @transform_0, window_bounds = array<i64: 1, 4, 256>}, {pipeline_mode = #tpu.pipeline_mode<synchronous>, transform_indices = @transform_1, window_bounds = array<i64: 4, 2>}, {pipeline_mode = #tpu.pipeline_mode<synchronous>, transform_indices = @transform_2, window_bounds = array<i64: 1, 2>}, {pipeline_mode = #tpu.pipeline_mode<synchronous>, transform_indices = @transform_3, window_bounds = array<i64: 2, 4>}, {pipeline_mode = #tpu.pipeline_mode<synchronous>, transform_indices = @transform_4, window_bounds = array<i64: 1, 4>}, {transform_indices = @transform_5, window_bounds = array<i64: 1, 4, 256>}]} {
    %c0 = arith.constant 0 : index
    %c0_0 = arith.constant 0 : index
    %c0_1 = arith.constant 0 : index
    %0 = vector.load %arg1[%c0, %c0_0, %c0_1] : memref<1x4x256xf32, #tpu.memory_space<vmem>>, vector<1x4x256xf32>
    %cst = arith.constant dense<0.000000e+00> : vector<1x4xf32>
    %1 = vector.multi_reduction <add>, %0, %cst [2] : vector<1x4x256xf32> to vector<1x4xf32>
    %cst_2 = arith.constant 2.560000e+02 : f32
    %2 = vector.broadcast %cst_2 : f32 to vector<1x4xf32>
    %3 = arith.divf %1, %2 : vector<1x4xf32>
    %c0_3 = arith.constant 0 : index
    %c0_4 = arith.constant 0 : index
    %4 = vector.load %arg2[%c0_3, %c0_4] : memref<4x2xf32, #tpu.memory_space<vmem>>, vector<4x2xf32>
    %cst_5 = arith.constant dense<0.000000e+00> : vector<1x2xf32>
    %5 = tpu.matmul %3, %4, %cst_5 {dimension_numbers = #tpu.dot_dimension_numbers<[1], [0], [0], [1], [0, 0, 1, 1], [], []>} : vector<1x4xf32>, vector<4x2xf32>, vector<1x2xf32> -> vector<1x2xf32>
    %c0_6 = arith.constant 0 : index
    %c0_7 = arith.constant 0 : index
    %6 = vector.load %arg3[%c0_6, %c0_7] : memref<1x2xf32, #tpu.memory_space<vmem>>, vector<1x2xf32>
    %7 = arith.addf %5, %6 : vector<1x2xf32>
    %cst_8 = arith.constant 0.000000e+00 : f32
    %8 = vector.broadcast %cst_8 : f32 to vector<1x2xf32>
    %9 = arith.maximumf %7, %8 : vector<1x2xf32>
    %c0_9 = arith.constant 0 : index
    %c0_10 = arith.constant 0 : index
    %10 = vector.load %arg4[%c0_9, %c0_10] : memref<2x4xf32, #tpu.memory_space<vmem>>, vector<2x4xf32>
    %cst_11 = arith.constant dense<0.000000e+00> : vector<1x4xf32>
    %11 = tpu.matmul %9, %10, %cst_11 {dimension_numbers = #tpu.dot_dimension_numbers<[1], [0], [0], [1], [0, 0, 1, 1], [], []>} : vector<1x2xf32>, vector<2x4xf32>, vector<1x4xf32> -> vector<1x4xf32>
    %c0_12 = arith.constant 0 : index
    %c0_13 = arith.constant 0 : index
    %12 = vector.load %arg5[%c0_12, %c0_13] : memref<1x4xf32, #tpu.memory_space<vmem>>, vector<1x4xf32>
    %13 = arith.addf %11, %12 : vector<1x4xf32>
    %14 = arith.negf %13 : vector<1x4xf32>
    %15 = math.exp %14 : vector<1x4xf32>
    %cst_14 = arith.constant 1.000000e+00 : f32
    %16 = vector.broadcast %cst_14 : f32 to vector<1x4xf32>
    %17 = arith.addf %16, %15 : vector<1x4xf32>
    %18 = arith.divf %16, %17 : vector<1x4xf32>
    %19 = vector.shape_cast %18 : vector<1x4xf32> to vector<1x4x1xf32>
    %20 = vector.broadcast %19 : vector<1x4x1xf32> to vector<1x4x256xf32>
    %21 = arith.mulf %0, %20 : vector<1x4x256xf32>
    %c0_15 = arith.constant 0 : index
    %c0_16 = arith.constant 0 : index
    %c0_17 = arith.constant 0 : index
    %22 = vector.load %arg6[%c0_15, %c0_16, %c0_17] : memref<1x4x256xf32, #tpu.memory_space<vmem>>, vector<1x4x256xf32>
    tpu.vector_store %arg6[%c0_15, %c0_16, %c0_17], %21 {strides = array<i32>} : memref<1x4x256xf32, #tpu.memory_space<vmem>>, vector<1x4x256xf32>,
    return
  }
  func.func @transform_0(%arg0: i32) -> (i32, i32, i32) {
    %c0_i32 = arith.constant 0 : i32
    %c0_i32_0 = arith.constant 0 : i32
    %c0_i32_1 = arith.constant 0 : i32
    return %arg0, %c0_i32, %c0_i32_0 : i32, i32, i32
  }
  func.func @transform_1(%arg0: i32) -> (i32, i32) {
    %c0_i32 = arith.constant 0 : i32
    %c0_i32_0 = arith.constant 0 : i32
    %c0_i32_1 = arith.constant 0 : i32
    return %c0_i32, %c0_i32_0 : i32, i32
  }
  func.func @transform_2(%arg0: i32) -> (i32, i32) {
    %c0_i32 = arith.constant 0 : i32
    %c0_i32_0 = arith.constant 0 : i32
    %c0_i32_1 = arith.constant 0 : i32
    return %c0_i32, %c0_i32_0 : i32, i32
  }
  func.func @transform_3(%arg0: i32) -> (i32, i32) {
    %c0_i32 = arith.constant 0 : i32
    %c0_i32_0 = arith.constant 0 : i32
    %c0_i32_1 = arith.constant 0 : i32
    return %c0_i32, %c0_i32_0 : i32, i32
  }
  func.func @transform_4(%arg0: i32) -> (i32, i32) {
    %c0_i32 = arith.constant 0 : i32
    %c0_i32_0 = arith.constant 0 : i32
    %c0_i32_1 = arith.constant 0 : i32
    return %c0_i32, %c0_i32_0 : i32, i32
  }
  func.func @transform_5(%arg0: i32) -> (i32, i32, i32) {
    %c0_i32 = arith.constant 0 : i32
    %c0_i32_0 = arith.constant 0 : i32
    %c0_i32_1 = arith.constant 0 : i32
    return %arg0, %c0_i32, %c0_i32_0 : i32, i32, i32
  }
}

</mosaic_0001>

<llo_original>
// kernel: tpu_custom_call.1
$region0: #{tpu_custom_call.1}
  #allocation0 [shape = 'u32[]', space=smem, size = 0x4, offset = 0x4, fixed_abs, tag = 'smem constant byte address 0x4 - core index']
  #allocation1 [shape = 'u32[72,128]{1,0:T(1,128)}', space=vmem, size = 0x9000, scoped, tag = 'internal scratch']
  %s0 = inlined_call_operand.hbm [shape: f32[2,4,256], index: 0, kind: input, shape index: {}]
  %s1 = inlined_call_operand.vmem [shape: f32[4,2], index: 1, kind: input, shape index: {}]
  %s2 = inlined_call_operand.vmem [shape: f32[1,2], index: 2, kind: input, shape index: {}]
  %s3 = inlined_call_operand.vmem [shape: f32[2,4], index: 3, kind: input, shape index: {}]
  %s4 = inlined_call_operand.vmem [shape: f32[1,4], index: 4, kind: input, shape index: {}]
  %s5 = inlined_call_operand.hbm [shape: f32[2,4,256], index: 5, kind: output, shape index: {}]
  %s6 = sld [smem:[#allocation0]]
  $region57: #{tpu_custom_call.1} parent=0
    _
  %s8 = ssub.s32 1, %s6
  %s9 = scalar_select 0, %s8, %s6
  $region1: #{tpu_custom_call.1} parent=0
    #allocation2 [shape = 'u8[8192]{0}', space=vmem, size = 0x2000, scoped, tag = 'input window, operand 0']
    #allocation3 [shape = 's32[2]{0}', space=sflag, size = 0x8, scoped, tag = 'scoped memory for tpu_custom_call.1']
    #allocation4 [shape = 's32[2]{0}', space=sflag, size = 0x8, scoped, tag = 'scoped memory for tpu_custom_call.1']
    #allocation5 [shape = 'u8[8192]{0}', space=vmem, size = 0x2000, scoped, tag = 'output window, operand 0']
    %10 = vsyncpa [#allocation3], 0
    %s11 = scalar_lea.sflag [#allocation3], 1
    %12 = vsyncpa %s11, 0
    %13 = vsyncpa [#allocation4], 0
    %s14 = scalar_lea.sflag [#allocation4], 1
    %15 = vsyncpa %s14, 0
    loop: start=0, step=1, limit=4
    $region2: #{tpu_custom_call.1} parent=1 // loop_pre_header
      _
    $region3: #{tpu_custom_call.1} parent=1 // loop_header
      %s17 = sphi 0, %s21
      %p18 = scmp.ge.s32.totalorder %s17, 4
      %s27 = sphi 0, %s29
      %s30 = sphi 0, %s27
      %s31 = sphi 0, %s30
      %s47 = sphi 0, %s31
      %s51 = sphi 0, %s51
      %s53 = sphi 0, %s51
      %s54 = sphi 0, %s53
      %s68 = sphi 0, %s54
      %s72 = sphi 0, %s72
      %s74 = sphi 0, %s72
      %s75 = sphi 0, %s74
      %s89 = sphi 0, %s75
      %s93 = sphi 0, %s93
      %s95 = sphi 0, %s93
      %s96 = sphi 0, %s95
      %s110 = sphi 0, %s96
      %s114 = sphi 0, %s114
      %s116 = sphi 0, %s114
      %s117 = sphi 0, %s116
      %s131 = sphi 0, %s117
      %s137 = sphi 0, %s139
      %s140 = sphi 0, %s137
      %s141 = sphi 0, %s140
      %s157 = sphi 0, %s141
    $region4: #{tpu_custom_call.1} parent=1 // loop_header_branch
      %20 = sbr.rel (%p18) target = $region8
    $region5: #{tpu_custom_call.1} parent=1 // loop_body
      %s22 = ssub.s32 %s17, 1
      %s23 = ssub.s32 %s17, 2
      %s24 = sadd.s32 %s17, 1
      %s25 = ssub.s32 %s17, %s24
      %p26 = scmp.eq.s32.totalorder %s25, 0
      %s28 = sadd.s32 %s27, 1
      %s29 = scalar_select %p26, %s27, %s28
      %p32 = pneg %p26
      %p33 = scmp.eq.s32.totalorder %s17, 1
      %p34 = por %p32, %p33
      %p35 = scmp.ne.s32.totalorder %s27, %s30
      %p36 = scmp.eq.s32.totalorder %s17, 0
      %p37 = por %p35, %p36
      %p38 = scmp.ne.s32.totalorder %s27, %s30
      %p39 = scmp.eq.s32.totalorder %s22, 1
      %p40 = por %p38, %p39
      %p41 = scmp.ne.s32.totalorder %s30, %s31
      %p42 = scmp.eq.s32.totalorder %s22, 0
      %p43 = por %p41, %p42
      %p44 = scmp.ne.s32.totalorder %s30, %s31
      %p45 = scmp.eq.s32.totalorder %s23, 1
      %p46 = por %p44, %p45
      %p48 = scmp.ne.s32.totalorder %s31, %s47
      %p49 = scmp.eq.s32.totalorder %s23, 0
      %p50 = por %p48, %p49
      %s52 = sadd.s32 %s51, 1
      %p55 = scmp.eq.s32.totalorder %s17, 1
      %p56 = scmp.ne.s32.totalorder %s51, %s53
      %p57 = scmp.eq.s32.totalorder %s17, 0
      %p58 = por %p56, %p57
      %p59 = scmp.ne.s32.totalorder %s51, %s53
      %p60 = scmp.eq.s32.totalorder %s22, 1
      %p61 = por %p59, %p60
      %p62 = scmp.ne.s32.totalorder %s53, %s54
      %p63 = scmp.eq.s32.totalorder %s22, 0
      %p64 = por %p62, %p63
      %p65 = scmp.ne.s32.totalorder %s53, %s54
      %p66 = scmp.eq.s32.totalorder %s23, 1
      %p67 = por %p65, %p66
      %p69 = scmp.ne.s32.totalorder %s54, %s68
      %p70 = scmp.eq.s32.totalorder %s23, 0
      %p71 = por %p69, %p70
      %s73 = sadd.s32 %s72, 1
      %p76 = scmp.eq.s32.totalorder %s17, 1
      %p77 = scmp.ne.s32.totalorder %s72, %s74
      %p78 = scmp.eq.s32.totalorder %s17, 0
      %p79 = por %p77, %p78
      %p80 = scmp.ne.s32.totalorder %s72, %s74
      %p81 = scmp.eq.s32.totalorder %s22, 1
      %p82 = por %p80, %p81
      %p83 = scmp.ne.s32.totalorder %s74, %s75
      %p84 = scmp.eq.s32.totalorder %s22, 0
      %p85 = por %p83, %p84
      %p86 = scmp.ne.s32.totalorder %s74, %s75
      %p87 = scmp.eq.s32.totalorder %s23, 1
      %p88 = por %p86, %p87
      %p90 = scmp.ne.s32.totalorder %s75, %s89
      %p91 = scmp.eq.s32.totalorder %s23, 0
      %p92 = por %p90, %p91
      %s94 = sadd.s32 %s93, 1
      %p97 = scmp.eq.s32.totalorder %s17, 1
      %p98 = scmp.ne.s32.totalorder %s93, %s95
      %p99 = scmp.eq.s32.totalorder %s17, 0
      %p100 = por %p98, %p99
      %p101 = scmp.ne.s32.totalorder %s93, %s95
      %p102 = scmp.eq.s32.totalorder %s22, 1
      %p103 = por %p101, %p102
      %p104 = scmp.ne.s32.totalorder %s95, %s96
      %p105 = scmp.eq.s32.totalorder %s22, 0
      %p106 = por %p104, %p105
      %p107 = scmp.ne.s32.totalorder %s95, %s96
      %p108 = scmp.eq.s32.totalorder %s23, 1
      %p109 = por %p107, %p108
      %p111 = scmp.ne.s32.totalorder %s96, %s110
      %p112 = scmp.eq.s32.totalorder %s23, 0
      %p113 = por %p111, %p112
      %s115 = sadd.s32 %s114, 1
      %p118 = scmp.eq.s32.totalorder %s17, 1
      %p119 = scmp.ne.s32.totalorder %s114, %s116
      %p120 = scmp.eq.s32.totalorder %s17, 0
      %p121 = por %p119, %p120
      %p122 = scmp.ne.s32.totalorder %s114, %s116
      %p123 = scmp.eq.s32.totalorder %s22, 1
      %p124 = por %p122, %p123
      %p125 = scmp.ne.s32.totalorder %s116, %s117
      %p126 = scmp.eq.s32.totalorder %s22, 0
      %p127 = por %p125, %p126
      %p128 = scmp.ne.s32.totalorder %s116, %s117
      %p129 = scmp.eq.s32.totalorder %s23, 1
      %p130 = por %p128, %p129
      %p132 = scmp.ne.s32.totalorder %s117, %s131
      %p133 = scmp.eq.s32.totalorder %s23, 0
      %p134 = por %p132, %p133
      %s135 = ssub.s32 %s17, %s24
      %p136 = scmp.eq.s32.totalorder %s135, 0
      %s138 = sadd.s32 %s137, 1
      %s139 = scalar_select %p136, %s137, %s138
      %p142 = pneg %p136
      %p143 = scmp.eq.s32.totalorder %s17, 1
      %p144 = por %p142, %p143
      %p145 = scmp.ne.s32.totalorder %s137, %s140
      %p146 = scmp.eq.s32.totalorder %s17, 0
      %p147 = por %p145, %p146
      %p148 = scmp.ne.s32.totalorder %s137, %s140
      %p149 = scmp.eq.s32.totalorder %s22, 1
      %p150 = por %p148, %p149
      %p151 = scmp.ne.s32.totalorder %s140, %s141
      %p152 = scmp.eq.s32.totalorder %s22, 0
      %p153 = por %p151, %p152
      %p154 = scmp.ne.s32.totalorder %s140, %s141
      %p155 = scmp.eq.s32.totalorder %s23, 1
      %p156 = por %p154, %p155
      %p158 = scmp.ne.s32.totalorder %s141, %s157
      %p159 = scmp.eq.s32.totalorder %s23, 0
      %p160 = por %p158, %p159
      %p161 = scmp.le.s32.totalorder 1, %s17
      %p162 = scmp.lt.s32.totalorder %s17, 3
      %p163 = pnand %p161, %p162
      %p164 = pneg %p163
      // Predicated region
      $region9: #{tpu_custom_call.1} parent=5 // pred_check
        _
      $region10: #{tpu_custom_call.1} parent=5 // pred_check_branch
        %166 = sbr.rel (%p163) target = $region12
      $region11: #{tpu_custom_call.1} parent=5 // pred_region
        %s167 = ssub.s32 %s17, 1
        // Predicated region
        $region13: #{tpu_custom_call.1} parent=11 // pred_check
          %p168 = pneg %p64
        $region14: #{tpu_custom_call.1} parent=11 // pred_check_branch
          %170 = sbr.rel (%p168) target = $region16
        $region15: #{tpu_custom_call.1} parent=11 // pred_region
          _
        $region16: #{tpu_custom_call.1} parent=11 // pred_fallthru
          _
        // Predicated region
        $region17: #{tpu_custom_call.1} parent=11 // pred_check
          %p171 = pneg %p85
        $region18: #{tpu_custom_call.1} parent=11 // pred_check_branch
          %173 = sbr.rel (%p171) target = $region20
        $region19: #{tpu_custom_call.1} parent=11 // pred_region
          _
        $region20: #{tpu_custom_call.1} parent=11 // pred_fallthru
          _
        // Predicated region
        $region21: #{tpu_custom_call.1} parent=11 // pred_check
          %p174 = pneg %p106
        $region22: #{tpu_custom_call.1} parent=11 // pred_check_branch
          %176 = sbr.rel (%p174) target = $region24
        $region23: #{tpu_custom_call.1} parent=11 // pred_region
          _
        $region24: #{tpu_custom_call.1} parent=11 // pred_fallthru
          _
        // Predicated region
        $region25: #{tpu_custom_call.1} parent=11 // pred_check
          %p177 = pneg %p127
        $region26: #{tpu_custom_call.1} parent=11 // pred_check_branch
          %179 = sbr.rel (%p177) target = $region28
        $region27: #{tpu_custom_call.1} parent=11 // pred_region
          _
        $region28: #{tpu_custom_call.1} parent=11 // pred_fallthru
          _
      $region12: #{tpu_custom_call.1} parent=5 // pred_fallthru
        _
      %p180 = scmp.lt.s32.totalorder %s17, 2
      // Predicated region
      $region29: #{tpu_custom_call.1} parent=5 // pred_check
        %p181 = pneg %p180
      $region30: #{tpu_custom_call.1} parent=5 // pred_check_branch
        %183 = sbr.rel (%p181) target = $region32
      $region31: #{tpu_custom_call.1} parent=5 // pred_region
        // Predicated region
        $region33: #{tpu_custom_call.1} parent=31 // pred_check
          %p184 = pneg %p37
        $region34: #{tpu_custom_call.1} parent=31 // pred_check_branch
          %186 = sbr.rel (%p184) target = $region36
        $region35: #{tpu_custom_call.1} parent=31 // pred_region
          %s187 = sand.u32 %s27, 1
          %s188 = scalar_lea.sflag [#allocation3], %s187
          %s189 = sand.u32 %s27, 1
          %s190 = smul.addr %s189, 8
          %s191 = scalar_lea.vmem [#allocation2], %s190
          %193 = vsyncadd %s188, 0
          %s194 = smul.addr %s17, 2
          %s195 = smul.addr %s194, 4
          %s196 = scalar_lea.hbm %s0, %s195
          %s198 = sshll.u32 %s196, 4
          %s199 = int_to_ptr.hbm [resolvable:$true] %s198
          %s200 = sshll.u32 %s191, 4
          %s201 = int_to_ptr.vmem [resolvable:$true] %s200
          %203 = dma.hbm_to_vmem [thread:$0]  %s199, 128, %s201, %s188
        $region36: #{tpu_custom_call.1} parent=31 // pred_fallthru
          _
      $region32: #{tpu_custom_call.1} parent=5 // pred_fallthru
        _
      %p204 = scmp.le.s32.totalorder 1, %s17
      %p205 = scmp.lt.s32.totalorder %s17, 3
      %p206 = pnand %p204, %p205
      %p207 = pneg %p206
      // Predicated region
      $region37: #{tpu_custom_call.1} parent=5 // pred_check
        _
      $region38: #{tpu_custom_call.1} parent=5 // pred_check_branch
        %209 = sbr.rel (%p206) target = $region40
      $region39: #{tpu_custom_call.1} parent=5 // pred_region
        %s210 = ssub.s32 %s17, 1
        %s211 = sand.u32 %s30, 1
        %s212 = scalar_lea.sflag [#allocation3], %s211
        %s213 = sand.u32 %s30, 1
        %s214 = smul.addr %s213, 8
        %s215 = scalar_lea.vmem [#allocation2], %s214
        // Predicated region
        $region41: #{tpu_custom_call.1} parent=39 // pred_check
          %p216 = pneg %p43
        $region42: #{tpu_custom_call.1} parent=39 // pred_check_branch
          %218 = sbr.rel (%p216) target = $region44
        $region43: #{tpu_custom_call.1} parent=39 // pred_region
          %220 = dma.done %s212, 128
        $region44: #{tpu_custom_call.1} parent=39 // pred_fallthru
          _
        %s221 = sand.u32 %s30, 1
        %s222 = scalar_lea.sflag [#allocation3], %s221
        %s223 = sand.u32 %s30, 1
        %s224 = smul.addr %s223, 8
        %s225 = scalar_lea.vmem [#allocation2], %s224
        %p226 = pneg %p43
        %p227 = pneg %p40
        %p228 = pneg %p64
        %p229 = pneg %p61
        %p230 = pneg %p85
        %p231 = pneg %p82
        %p232 = pneg %p106
        %p233 = pneg %p103
        %p234 = pneg %p127
        %p235 = pneg %p124
        %p236 = pneg %p153
        %p237 = pneg %p150
        %s238 = sand.u32 %s140, 1
        %s239 = scalar_lea.sflag [#allocation4], %s238
        %s240 = sand.u32 %s140, 1
        %s241 = smul.addr %s240, 8
        %s242 = scalar_lea.vmem [#allocation5], %s241
        %v243 = vld [vmem:[%s215] sm:$0xff]
        %245 = vst [vmem:[#allocation1] ss:$2 sm:$0xff] %v243
        %v246 = vld.sshfl [vmem:[#allocation1] sm:$0xff pattern:$0x75316420]
        %v247 = vld.sshfl [vmem:[#allocation1 + $0x8] sm:$0xff pattern:$0x75316420]
        %vm250 = vcmask 1043456
        %v251 = vsel %vm250, %v246, 0.0
        %v252 = vsel %vm250, %v247, 0.0
        %v253 = vadd.f32 %v251, %v252
        %254 = vadd.xlane.f32.xlu0 %v253
        %v255 = vpop.xlane.xlu0 %254
        %v256 = vrcp.pop 256.0
        %v257 = vmul.f32 256.0, %v256
        %v258 = vsub.f32 1.0, %v257
        %v259 = vmul.f32 %v256, %v258
        %v260 = vadd.f32 %v256, %v259
        %vm261 = vweird.f32 %v256
        %v262 = vsel %vm261, %v256, %v260
        %v263 = vmul.f32 %v255, %v262
        %v264 = vld [vmem:[%s1] sm:$0xf]
        %v265 = vld [vmem:[%s2] sm:$0x1]
        %v267 = vlaneseq
        %v268 = vand.u32 %v267, 127
        %v269 = vperm.slane %v263, %v268
        %vm270 = vcmask 31744
        %v271 = vsel %vm270, %v269, 0
        %v274 = vsel %vm250, %v264, 0
        %276 = vmatpush.msra.mxu0 0.0
        %277 = vmatpush.msra.mxu0 0.0
        %278 = vmatpush.msra.mxu0 0.0
        %279 = vmatpush.msra.mxu0 0.0
        %280 = vmatpush.msra.mxu0 0.0
        %281 = vmatpush.msra.mxu0 0.0
        %282 = vmatpush.msra.mxu0 0.0
        %283 = vmatpush.msra.mxu0 0.0
        %284 = vmatpush.msra.mxu0 0.0
        %285 = vmatpush.msra.mxu0 0.0
        %286 = vmatpush.msra.mxu0 0.0
        %287 = vmatpush.msra.mxu0 0.0
        %288 = vmatpush.msra.mxu0 0.0
        %289 = vmatpush.msra.mxu0 0.0
        %290 = vmatpush.msra.mxu0 0.0
        %291 = vmatpush.msra.mxu0 %v274
        %292 = vmatmul.f32.gmra.mxu0 %v271
        %v293 = vpop.f32.mrf.mxu0
        %v294 = vadd.f32 %v265, %v293
        %295 = vdwg.mxu0
        %v296 = vmax.f32 %v294, 0.0
        %v297 = vld [vmem:[%s3] sm:$0x3]
        %v298 = vld [vmem:[%s4] sm:$0x1]
        %vm299 = vcmask 15360
        %v301 = vsel %vm299, %v296, 0
        %vm303 = vcmask 1041408
        %v305 = vsel %vm303, %v297, 0
        %307 = vmatpush.msra.mxu0 0.0
        %308 = vmatpush.msra.mxu0 0.0
        %309 = vmatpush.msra.mxu0 0.0
        %310 = vmatpush.msra.mxu0 0.0
        %311 = vmatpush.msra.mxu0 0.0
        %312 = vmatpush.msra.mxu0 0.0
        %313 = vmatpush.msra.mxu0 0.0
        %314 = vmatpush.msra.mxu0 0.0
        %315 = vmatpush.msra.mxu0 0.0
        %316 = vmatpush.msra.mxu0 0.0
        %317 = vmatpush.msra.mxu0 0.0
        %318 = vmatpush.msra.mxu0 0.0
        %319 = vmatpush.msra.mxu0 0.0
        %320 = vmatpush.msra.mxu0 0.0
        %321 = vmatpush.msra.mxu0 0.0
        %322 = vmatpush.msra.mxu0 %v305
        %323 = vmatmul.f32.gmra.mxu0 %v301
        %v324 = vpop.f32.mrf.mxu0
        %v325 = vadd.f32 %v298, %v324
        %326 = vdwg.mxu0
        %v327 = vxor.u32 %v325, 2147483648
        %v328 = vmul.f32 %v327, 1.442695
        %v329 = vpow.pop %v328
        %v330 = vadd.f32 %v329, 1.0
        %v331 = vrcp.pop %v330
        %v332 = vmul.f32 %v330, %v331
        %v333 = vsub.f32 1.0, %v332
        %v334 = vmul.f32 %v331, %v333
        %v335 = vadd.f32 %v331, %v334
        %vm336 = vweird.f32 %v330
        %vm337 = vweird.f32 %v331
        %vm338 = vmor %vm336, %vm337
        %v339 = vsel %vm338, %v331, %v335
        %v340 = vand.u32 2147483647, %v330
        %vm341 = vcmp.eq.f32.partialorder %v340, 8.507059e+37
        %v342 = vand.u32 %v330, 2147483648
        %v343 = vor.u32 1.1754944e-38, %v342
        %v344 = vsel %vm341, %v343, %v339
        %v345 = vmul.f32 1.0, %v344
        %v346 = vperm.slane %v345, 0
        %v347 = vlaneseq
        %v348 = vshrl.u32 %v347, 7
        %350 = vset.pattern.permute.xlu0 %v348
        %351 = vperm.xlu0 %350, %v346
        %v352 = vpop.permute.xlu0 %351
        %v355 = vunpack.c.l.s4 839922192
        %v356 = vunpack.c.0.s8 %v355
        %v357 = vperm.slane %v352, %v356
        %v359 = vmul.f32 %v243, %v357
        %360 = vst [vmem:[%s242] sm:$0xff] %v359
        %s361 = sand.u32 %s140, 1
        %s362 = scalar_lea.sflag [#allocation4], %s361
        %s363 = sand.u32 %s140, 1
        %s364 = smul.addr %s363, 8
        %s365 = scalar_lea.vmem [#allocation5], %s364
        // Predicated region
        $region45: #{tpu_custom_call.1} parent=39 // pred_check
          %p366 = pneg %p150
        $region46: #{tpu_custom_call.1} parent=39 // pred_check_branch
          %368 = sbr.rel (%p366) target = $region48
        $region47: #{tpu_custom_call.1} parent=39 // pred_region
          %370 = vsyncadd %s362, 0
          %s371 = smul.addr %s22, 2
          %s372 = smul.addr %s371, 4
          %s373 = scalar_lea.hbm %s5, %s372
          %s375 = sshll.u32 %s365, 4
          %s376 = int_to_ptr.vmem [resolvable:$true] %s375
          %s377 = sshll.u32 %s373, 4
          %s378 = int_to_ptr.hbm [resolvable:$true] %s377
          %380 = dma.vmem_to_hbm [thread:$0]  %s376, 128, %s378, %s362
        $region48: #{tpu_custom_call.1} parent=39 // pred_fallthru
          _
      $region40: #{tpu_custom_call.1} parent=5 // pred_fallthru
        _
      %p381 = scmp.le.s32.totalorder 2, %s17
      // Predicated region
      $region49: #{tpu_custom_call.1} parent=5 // pred_check
        %p382 = pneg %p381
      $region50: #{tpu_custom_call.1} parent=5 // pred_check_branch
        %384 = sbr.rel (%p382) target = $region52
      $region51: #{tpu_custom_call.1} parent=5 // pred_region
        %s385 = ssub.s32 %s17, 2
        // Predicated region
        $region53: #{tpu_custom_call.1} parent=51 // pred_check
          %p386 = pneg %p156
        $region54: #{tpu_custom_call.1} parent=51 // pred_check_branch
          %388 = sbr.rel (%p386) target = $region56
        $region55: #{tpu_custom_call.1} parent=51 // pred_region
          %s389 = sand.u32 %s141, 1
          %s390 = scalar_lea.sflag [#allocation4], %s389
          %s391 = sand.u32 %s141, 1
          %s392 = smul.addr %s391, 8
          %s393 = scalar_lea.vmem [#allocation5], %s392
          %395 = dma.done %s390, 128
        $region56: #{tpu_custom_call.1} parent=51 // pred_fallthru
          _
      $region52: #{tpu_custom_call.1} parent=5 // pred_fallthru
        _
    $region6: #{tpu_custom_call.1} parent=1 // loop_footer
      %s21 = sadd.s32 1, %s17
    $region7: #{tpu_custom_call.1} parent=1 // loop_footer_branch
      %16 = sbr.rel target = $region3
    $region8: #{tpu_custom_call.1} parent=1 // loop_exit
      _
    %396 = vsyncpa [#allocation3], 1
    %s397 = scalar_lea.sflag [#allocation3], 1
    %398 = vsyncpa %s397, 1
    %399 = vsyncpa [#allocation4], 1
    %s400 = scalar_lea.sflag [#allocation4], 1
    %401 = vsyncpa %s400, 1

</llo_original>
